<compile_context>
chip_gen: v7x
topology: tpu7x:2x2x1
jax: 0.10.0
libtpu: 0.0.40
codegen_flags: <defaults>
</compile_context>

<pallas_src>
import functools
import math

import jax
import jax.numpy as jnp
from jax.experimental import pallas as pl
from jax.experimental.pallas import tpu as pltpu


# --------------------------------------------------------------------------- #
# Kernels
# --------------------------------------------------------------------------- #
def _pos_enc_eval_kernel(x_ref, pe_ref, o_ref, *, batch, d):
    """out = x + pe, pe broadcast over the batch copies folded into lanes.

    The batch loop unrolls at trace time; static ref slices are zero-cost views
    (D % 128 == 0 on this path), so no lane-concat relayout and no (ts, B*D)
    pe temporary.
    """
    pe = pe_ref[...]                                        # fp32 (ts, d)
    for b in range(batch):
        sl = slice(b * d, (b + 1) * d)
        o_ref[:, sl] = (x_ref[:, sl].astype(jnp.float32) + pe).astype(o_ref.dtype)


def _pos_enc_train_prng_kernel(seed_ref, x_ref, pe_ref, o_ref, *,
                               batch, d, keep_threshold, inv_keep):
    """out = inverted-dropout(x + pe); mask drawn from the on-chip PRNG (TPU)."""
    pe = pe_ref[...]
    # Per-tile seed so every grid step draws an independent mask.
    pltpu.prng_seed(seed_ref[0] + pl.program_id(0))
    for b in range(batch):
        sl = slice(b * d, (b + 1) * d)
        y = x_ref[:, sl].astype(jnp.float32) + pe
        bits = pltpu.bitcast(pltpu.prng_random_bits(y.shape), jnp.uint32)
        keep = bits >= jnp.uint32(keep_threshold)           # P(keep) = 1 - p
        o_ref[:, sl] = jnp.where(keep, y * inv_keep, 0.0).astype(o_ref.dtype)


def _pos_enc_train_bits_kernel(x_ref, pe_ref, bits_ref, o_ref, *,
                               batch, d, keep_threshold, inv_keep):
    """Same dropout, random bits supplied as an input (non-TPU / interpret)."""
    pe = pe_ref[...]
    for b in range(batch):
        sl = slice(b * d, (b + 1) * d)
        y = x_ref[:, sl].astype(jnp.float32) + pe
        keep = bits_ref[:, sl] >= jnp.uint32(keep_threshold)
        o_ref[:, sl] = jnp.where(keep, y * inv_keep, 0.0).astype(o_ref.dtype)


# --------------------------------------------------------------------------- #
# Tiling / layout helpers
# --------------------------------------------------------------------------- #
def _tpu_budget():
    """(per-buffer tile target bytes, vmem_limit_bytes or None), per generation."""
    target = 2 * 1024 * 1024            # safe under v5e's 16 MiB scoped default
    limit = None
    if jax.default_backend() != "tpu":
        return target, limit
    try:
        info = pltpu.get_tpu_info()
        vmem = int(getattr(info, "vmem_capacity_bytes", 0) or 0)
        name = str(getattr(info, "chip_version", "")).lower()
    except Exception:                    # defensive: unknown topology / fields
        return target, limit
    if 0 < vmem <= 80 * 1024 * 1024:
        # v7x: 64 MiB physical per TC, ~3.2 TB/s HBM -> bigger tiles pay off.
        # 2x double-buffered (x + pe + out) @ 6 MiB ~= 36 MiB < 44 MiB limit.
        target, limit = 6 * 1024 * 1024, 44 * 1024 * 1024
    elif vmem > 80 * 1024 * 1024 and "5" not in name:
        # v6e (128 MiB physical): 4 MiB tiles, raise the 32 MiB scoped default.
        target, limit = 4 * 1024 * 1024, 40 * 1024 * 1024
    # v5e (or unidentified): keep 2 MiB and the default scoped limit.
    return target, limit


def _pick_rows(n_rows, row_bytes, target_bytes):
    """Rows per grid step: ~target_bytes per x buffer, multiple of 8 sublanes.
    When the whole problem fits a single tile, split it (>=16 rows) so the
    'parallel' grid axis has >=2 steps and both v7x TensorCores get work."""
    rows = max(1, target_bytes // max(1, row_bytes))
    ts = max(8, (rows // 8) * 8)
    if ts >= n_rows:
        ts = n_rows
        if n_rows >= 16:
            half = ((n_rows + 1) // 2 + 7) // 8 * 8
            if half < n_rows:
                ts = half
    return ts


def _lane_dense_flatten(S, B, D):
    """(rows, width) with width a large multiple of 128 when possible, so the
    output is lane-dense (unmasked vst) even for tiny B*D."""
    n = S * B * D
    for width in (1024, 512, 256, 128):
        if n % width == 0:
            return n // width, width
    return S, B * D                      # fallback: still tileable over rows


# --------------------------------------------------------------------------- #
# Module wrapper
# --------------------------------------------------------------------------- #
class PositionalEncodingPallas:
    """JAX/Pallas port of the PyTorch PositionalEncoding module."""

    def __init__(self, d_model, dropout=0.1, max_len=5000):
        # sin/cos table construction mirrors torch __init__; plain JAX setup.
        pos = jnp.arange(max_len, dtype=jnp.float32)[:, None]            # (L, 1)
        div = jnp.exp(
            jnp.arange(0, d_model, 2, dtype=jnp.float32)
            * (-math.log(10000.0) / d_model))                            # (D/2,)
        pe = jnp.zeros((max_len, d_model), jnp.float32)
        pe = pe.at[:, 0::2].set(jnp.sin(pos * div))
        pe = pe.at[:, 1::2].set(jnp.cos(pos * div))
        self.pe = pe                     # fp32 (max_len, d_model)
        self.p = float(dropout)
        self.d_model = d_model
        self._cache = {}                 # cached per-(S[,B]) views of the table

    # Cached views so each forward doesn't re-emit a slice/broadcast XLA op.
    def _pe_rows(self, S):
        key = ("rows", S)
        if key not in self._cache:
            self._cache[key] = self.pe[:S]
        return self._cache[key]

    def _pe_bcast(self, S, B):
        key = ("bcast", S, B)
        if key not in self._cache:
            pe = jnp.broadcast_to(self.pe[:S, None, :], (S, B, self.d_model))
            self._cache[key] = pe.reshape(S, B * self.d_model)
        return self._cache[key]

    def __call__(self, x, *, training=False, seed=0, donate_x=False):
        S, B, D = x.shape
        dtype = x.dtype
        itemsize = jnp.dtype(dtype).itemsize

        use_dropout = training and self.p > 0.0
        if use_dropout and self.p >= 1.0:
            return jnp.zeros_like(x)     # degenerate: everything dropped

        # ---- layout plumbing: lane-dense 2-D view ---------------------------
        if D % 128 == 0:
            # Batch folded into lanes; pe HBM traffic stays 1/B of x traffic.
            rows, width, batch, d = S, B * D, B, D
            x2 = x.reshape(rows, width)
            pe2 = self._pe_rows(S)                              # fp32 (S, D)
        else:
            # Small / unaligned D (e.g. B*D=64): pre-broadcast pe over batch
            # (cached) and flatten so the last dim is a big multiple of 128.
            rows, width = _lane_dense_flatten(S, B, D)
            batch, d = 1, width
            x2 = x.reshape(rows, width)
            pe2 = self._pe_bcast(S, B).reshape(rows, width)     # fp32

        # ---- generation-aware tiling ----------------------------------------
        target_bytes, vmem_limit = _tpu_budget()
        ts = _pick_rows(rows, width * itemsize, target_bytes)
        grid = (pl.cdiv(rows, ts),)

        x_spec = pl.BlockSpec((ts, width), lambda s: (s, 0))
        pe_spec = pl.BlockSpec((ts, pe2.shape[1]), lambda s: (s, 0))
        out_spec = pl.BlockSpec((ts, width), lambda s: (s, 0))

        flops = rows * width                          # one VPU add per element
        bytes_accessed = 2 * rows * width * itemsize + pe2.size * 4

        in_specs = [x_spec, pe_spec]
        args = [x2, pe2]
        io_aliases = {}

        if not use_dropout:
            kernel = functools.partial(_pos_enc_eval_kernel, batch=batch, d=d)
            if donate_x:
                io_aliases = {0: 0}
        else:
            # NOTE: stochastic dropout; a bitwise match to torch's RNG stream
            # is not possible.
            keep_threshold = min(int(round(self.p * 2.0 ** 32)), 2 ** 32 - 1)
            inv_keep = 1.0 / (1.0 - self.p)
            if jax.default_backend() == "tpu":
                # In-kernel hardware PRNG: no extra HBM traffic for the mask.
                kernel = functools.partial(
                    _pos_enc_train_prng_kernel, batch=batch, d=d,
                    keep_threshold=keep_threshold, inv_keep=inv_keep)
                in_specs = ([pl.BlockSpec(memory_space=pltpu.MemorySpace.SMEM)]
                            + in_specs)
                args = [jnp.asarray([seed], jnp.int32)] + args
                if donate_x:
                    io_aliases = {1: 0}
            else:
                # Portable fallback (interpret / CPU): bits generated host-side.
                kernel = functools.partial(
                    _pos_enc_train_bits_kernel, batch=batch, d=d,
                    keep_threshold=keep_threshold, inv_keep=inv_keep)
                bits = jax.random.bits(jax.random.PRNGKey(seed), (rows, width),
                                       dtype=jnp.uint32)
                in_specs = in_specs + [pl.BlockSpec((ts, width),
                                                    lambda s: (s, 0))]
                args = args + [bits]
                bytes_accessed += rows * width * 4
                if donate_x:
                    io_aliases = {0: 0}

        out = pl.pallas_call(
            kernel,
            out_shape=jax.ShapeDtypeStruct((rows, width), dtype),
            grid=grid,
            in_specs=in_specs,
            out_specs=out_spec,
            input_output_aliases=io_aliases,
            cost_estimate=pl.CostEstimate(
                flops=flops, transcendentals=0,
                bytes_accessed=int(bytes_accessed)),
            compiler_params=pltpu.CompilerParams(
                dimension_semantics=("parallel",),
                vmem_limit_bytes=vmem_limit),
        )(*args)

        return out.reshape(S, B, D)


# --------------------------------------------------------------------------- #
# Self-test
# --------------------------------------------------------------------------- #
if __name__ == "__main__":
    key = jax.random.PRNGKey(0)
    k1, k2 = jax.random.split(key)

    # Case 1: small d_model (typical toy config) -> lane-dense flattened path.
    S, B, D = 8, 2, 32
    x = jax.random.normal(k1, (S, B, D), dtype=jnp.float32)
    mod = PositionalEncodingPallas(d_model=D, dropout=0.1, max_len=64)

    # Eval-mode forward (dropout = identity), matching module.eval() semantics.
    y = jax.block_until_ready(mod(x, training=False))
    ref = x + mod.pe[:S][:, None, :]
    assert y.shape == (S, B, D)
    assert jnp.allclose(y, ref, atol=1e-6), "eval mismatch vs reference"

    # Training-mode forward: kept elements == (x+pe)/(1-p), dropped == 0.
    y_tr = jax.block_until_ready(mod(x, training=True, seed=123))
    assert y_tr.shape == (S, B, D)
    assert bool(jnp.all(jnp.isfinite(y_tr)))
    expected = ref / (1.0 - mod.p)
    kept_ok = jnp.isclose(y_tr, expected, rtol=1e-5, atol=1e-5)
    dropped_ok = (y_tr == 0.0)
    assert bool(jnp.all(kept_ok | dropped_ok)), "train-mode values invalid"
    keep_frac = float(jnp.mean(kept_ok.astype(jnp.float32)))
    assert 0.6 <= keep_frac <= 1.0, "dropout keep fraction implausible"

    # Case 2: lane-aligned d_model (D % 128 == 0) -> per-batch slice path.
    S2, B2, D2 = 16, 2, 128
    x_a = jax.random.normal(k2, (S2, B2, D2), dtype=jnp.float32)
    mod2 = PositionalEncodingPallas(d_model=D2, dropout=0.1, max_len=64)
    y2 = jax.block_until_ready(mod2(x_a, training=False))
    ref2 = x_a + mod2.pe[:S2][:, None, :]
    assert jnp.allclose(y2, ref2, atol=1e-6), "eval mismatch (aligned path)"
    y2_tr = jax.block_until_ready(mod2(x_a, training=True, seed=7))
    assert y2_tr.shape == (S2, B2, D2)
    assert bool(jnp.all(jnp.isfinite(y2_tr)))

    print("KERNEL_OK")
</pallas_src>

<mosaic_0001>
module attributes {stable_mosaic.version = 11 : i64} {
  func.func @_pos_enc_eval_kernel(%arg0: i32, %arg1: memref<1x512xf32, #tpu.memory_space<vmem>>, %arg2: memref<1x512xf32, #tpu.memory_space<vmem>>, %arg3: memref<1x512xf32, #tpu.memory_space<vmem>>) attributes {dimension_semantics = [#tpu.dimension_semantics<parallel>], iteration_bounds = array<i64: 1>, scalar_prefetch = 0 : i64, scratch_operands = 0 : i64, tpu.core_type = #tpu.core_type<tc>, window_params = [{transform_indices = @transform_0, window_bounds = array<i64: 1, 512>}, {transform_indices = @transform_1, window_bounds = array<i64: 1, 512>}, {transform_indices = @transform_2, window_bounds = array<i64: 1, 512>}]} {
    %c0 = arith.constant 0 : index
    %c0_0 = arith.constant 0 : index
    %0 = vector.load %arg2[%c0, %c0_0] : memref<1x512xf32, #tpu.memory_space<vmem>>, vector<1x512xf32>
    %c0_1 = arith.constant 0 : index
    %c0_2 = arith.constant 0 : index
    %1 = vector.load %arg1[%c0_1, %c0_2] : memref<1x512xf32, #tpu.memory_space<vmem>>, vector<1x512xf32>
    %2 = arith.addf %1, %0 : vector<1x512xf32>
    %c0_3 = arith.constant 0 : index
    %c0_4 = arith.constant 0 : index
    %3 = vector.load %arg3[%c0_3, %c0_4] : memref<1x512xf32, #tpu.memory_space<vmem>>, vector<1x512xf32>
    tpu.vector_store %arg3[%c0_3, %c0_4], %2 {strides = array<i32>} : memref<1x512xf32, #tpu.memory_space<vmem>>, vector<1x512xf32>,
    return
  }
  func.func @transform_0(%arg0: i32) -> (i32, i32) {
    %c0_i32 = arith.constant 0 : i32
    %c0_i32_0 = arith.constant 0 : i32
    return %arg0, %c0_i32 : i32, i32
  }
  func.func @transform_1(%arg0: i32) -> (i32, i32) {
    %c0_i32 = arith.constant 0 : i32
    %c0_i32_0 = arith.constant 0 : i32
    return %arg0, %c0_i32 : i32, i32
  }
  func.func @transform_2(%arg0: i32) -> (i32, i32) {
    %c0_i32 = arith.constant 0 : i32
    %c0_i32_0 = arith.constant 0 : i32
    return %arg0, %c0_i32 : i32, i32
  }
}

</mosaic_0001>

<llo_original>
// kernel: tpu_custom_call.1
$region0: #{tpu_custom_call.1}
  #allocation0 [shape = 'u32[]', space=smem, size = 0x4, offset = 0x4, fixed_abs, tag = 'smem constant byte address 0x4 - core index']
  #allocation1 [shape = 'u32[144,128]{1,0:T(1,128)}', space=vmem, size = 0x12000, scoped, tag = 'internal scratch']
  %s0 = inlined_call_operand.hbm [shape: f32[1,512], index: 0, kind: input, shape index: {}]
  %s1 = inlined_call_operand.hbm [shape: f32[1,512], index: 1, kind: input, shape index: {}]
  %s2 = inlined_call_operand.hbm [shape: f32[1,512], index: 2, kind: output, shape index: {}]
  %s3 = sld [smem:[#allocation0]]
  $region26: #{tpu_custom_call.1} parent=0
    _
  %s5 = ssub.s32 1, %s3
  %s6 = scalar_select 0, %s5, %s3
  $region1: #{tpu_custom_call.1} parent=0
    #allocation2 [shape = 'u8[2048]{0}', space=vmem, size = 0x800, scoped, tag = 'input window, operand 0, single buffered']
    #allocation3 [shape = 's32[1]{0}', space=sflag, size = 0x4, scoped, tag = 'scoped memory for tpu_custom_call.1']
    #allocation4 [shape = 's32[1]{0}', space=sflag, size = 0x4, scoped, tag = 'scoped memory for tpu_custom_call.1']
    #allocation5 [shape = 'u8[2048]{0}', space=vmem, size = 0x800, scoped, tag = 'input window, operand 1, single buffered']
    #allocation6 [shape = 's32[1]{0}', space=sflag, size = 0x4, scoped, tag = 'scoped memory for tpu_custom_call.1']
    #allocation7 [shape = 'u8[2048]{0}', space=vmem, size = 0x800, scoped, tag = 'output window, operand 0, single buffered']
    %7 = vsyncpa [#allocation3], 0
    %8 = vsyncpa [#allocation6], 0
    %9 = vsyncpa [#allocation4], 0
    // Predicated region
    $region2: #{tpu_custom_call.1} parent=1 // pred_check
      _
    $region3: #{tpu_custom_call.1} parent=1 // pred_check_branch
      %11 = sbr.rel (0) target = $region5
    $region4: #{tpu_custom_call.1} parent=1 // pred_region
      %s13 = ssub.s32 64, 64
      %14 = vsyncadd [#allocation3], %s13
      %s16 = sshll.u32 [#allocation2], 4
      %s17 = int_to_ptr.vmem [resolvable:$true] %s16
      %19 = dma.hbm_to_vmem [thread:$0]  %s0, 64, %s17, [#allocation3]
    $region5: #{tpu_custom_call.1} parent=1 // pred_fallthru
      _
    // Predicated region
    $region6: #{tpu_custom_call.1} parent=1 // pred_check
      _
    $region7: #{tpu_custom_call.1} parent=1 // pred_check_branch
      %21 = sbr.rel (0) target = $region9
    $region8: #{tpu_custom_call.1} parent=1 // pred_region
      %s23 = ssub.s32 64, 64
      %24 = vsyncadd [#allocation6], %s23
      %s26 = sshll.u32 [#allocation5], 4
      %s27 = int_to_ptr.vmem [resolvable:$true] %s26
      %29 = dma.hbm_to_vmem [thread:$0]  %s1, 64, %s27, [#allocation6]
    $region9: #{tpu_custom_call.1} parent=1 // pred_fallthru
      _
    // Predicated region
    $region10: #{tpu_custom_call.1} parent=1 // pred_check
      _
    $region11: #{tpu_custom_call.1} parent=1 // pred_check_branch
      %31 = sbr.rel (0) target = $region13
    $region12: #{tpu_custom_call.1} parent=1 // pred_region
      %32 = dma.done [#allocation3], 64
    $region13: #{tpu_custom_call.1} parent=1 // pred_fallthru
      _
    // Predicated region
    $region14: #{tpu_custom_call.1} parent=1 // pred_check
      _
    $region15: #{tpu_custom_call.1} parent=1 // pred_check_branch
      %34 = sbr.rel (0) target = $region17
    $region16: #{tpu_custom_call.1} parent=1 // pred_region
      %35 = dma.done [#allocation6], 64
    $region17: #{tpu_custom_call.1} parent=1 // pred_fallthru
      _
    %v36 = vld [vmem:[#allocation5] sm:$0xf]
    %v37 = vld [vmem:[#allocation2] sm:$0xf]
    %v38 = vadd.f32 %v37, %v36
    %v39 = vlaneseq
    %vm40 = vcmp.ge.s32.totalorder %v39, 0
    %vm41 = vcmp.lt.s32.totalorder %v39, 512
    %vm42 = vmand %vm40, %vm41
    %43 = vst.msk [vmem:[#allocation7] sm:$0xf] %vm42, %v38
    // Predicated region
    $region18: #{tpu_custom_call.1} parent=1 // pred_check
      _
    $region19: #{tpu_custom_call.1} parent=1 // pred_check_branch
      %45 = sbr.rel (0) target = $region21
    $region20: #{tpu_custom_call.1} parent=1 // pred_region
      %s47 = ssub.s32 64, 64
      %48 = vsyncadd [#allocation4], %s47
      %s50 = sshll.u32 [#allocation7], 4
      %s51 = int_to_ptr.vmem [resolvable:$true] %s50
      %53 = dma.vmem_to_hbm [thread:$0]  %s51, 64, %s2, [#allocation4]
    $region21: #{tpu_custom_call.1} parent=1 // pred_fallthru
      _
    // Predicated region
    $region22: #{tpu_custom_call.1} parent=1 // pred_check
      _
    $region23: #{tpu_custom_call.1} parent=1 // pred_check_branch
      %55 = sbr.rel (0) target = $region25
    $region24: #{tpu_custom_call.1} parent=1 // pred_region
      %56 = dma.done [#allocation4], 64
    $region25: #{tpu_custom_call.1} parent=1 // pred_fallthru
      _
    %57 = vsyncpa [#allocation3], 1
    %58 = vsyncpa [#allocation6], 1
    %59 = vsyncpa [#allocation4], 1

</llo_original>
